<compile_context>
chip_gen: v5e
topology: v5e:2x2
jax: 0.10.0
libtpu: 0.0.40
codegen_flags: <defaults>
</compile_context>

<pallas_src>
import math
from functools import partial

import jax
import jax.numpy as jnp
from jax import lax
from jax.experimental import pallas as pl
from jax.experimental.pallas import tpu as pltpu

_LN_EPS = 1e-5                      # PyTorch nn.LayerNorm default
_VMEM_LIMIT_BYTES = 48 * 1024 * 1024  # safe on v5e/v6e (128 MiB phys) and v7x (64 MiB phys)
_VMEM_BUDGET = 40 * 1024 * 1024     # planning budget (leave headroom for compiler scratch)

_TILE_CANDIDATES = (1024, 512, 256, 128, 64, 32, 16, 8)


def _pick_row_tile(m: int, per_row_bytes: int, fixed_bytes: int) -> int:
    """Largest row tile that divides M, is a multiple of 8, and fits the VMEM budget."""
    cands = [t for t in _TILE_CANDIDATES if m % t == 0]
    if not cands:
        return m  # M not a multiple of 8: use one full-extent block (allowed).
    for t in cands:
        if fixed_bytes + t * per_row_bytes <= _VMEM_BUDGET:
            return t
    return cands[-1]


# ---------------------------------------------------------------------------
# Kernels
# ---------------------------------------------------------------------------

def _ln_matmul_kernel(x_ref, g_ref, b_ref, w_ref, wb_ref, o_ref, *, apply_gelu):
    # x_ref : (TM, Din) row tile; g/b: (1, Din) LN params; w: (Din, Dout); wb: (1, Dout)
    x = x_ref[...].astype(jnp.float32)
    mu = jnp.mean(x, axis=-1, keepdims=True)
    xc = x - mu
    var = jnp.mean(xc * xc, axis=-1, keepdims=True)
    xn = xc * lax.rsqrt(var + _LN_EPS)
    xn = xn * g_ref[...] + b_ref[...]
    y = jnp.dot(xn, w_ref[...], preferred_element_type=jnp.float32) + wb_ref[...]
    if apply_gelu:
        y = y * jax.nn.sigmoid(1.702 * y)  # QuickGELU
    o_ref[...] = y


def _ln_mlp_kernel(x_ref, g_ref, b_ref, wfc_ref, bfc_ref, wpj_ref, bpj_ref, o_ref):
    # Fused MLP sub-block: o = QuickGELU(LN(x) @ Wfc + bfc) @ Wproj + bproj + x
    x = x_ref[...].astype(jnp.float32)
    mu = jnp.mean(x, axis=-1, keepdims=True)
    xc = x - mu
    var = jnp.mean(xc * xc, axis=-1, keepdims=True)
    xn = xc * lax.rsqrt(var + _LN_EPS)
    xn = xn * g_ref[...] + b_ref[...]
    h = jnp.dot(xn, wfc_ref[...], preferred_element_type=jnp.float32) + bfc_ref[...]
    h = h * jax.nn.sigmoid(1.702 * h)
    y = jnp.dot(h, wpj_ref[...], preferred_element_type=jnp.float32) + bpj_ref[...]
    o_ref[...] = y + x  # residual


def _matmul_bias_residual_kernel(x_ref, w_ref, b_ref, r_ref, o_ref):
    # o = x @ W + b + residual (single lane-dense full-width store)
    y = jnp.dot(x_ref[...], w_ref[...], preferred_element_type=jnp.float32)
    o_ref[...] = y + b_ref[...] + r_ref[...]


def _attention_kernel(q_ref, k_ref, v_ref, m_ref, o_ref, *, scale):
    # q/k/v_ref: (G, L, dh) -- a group of G heads per grid step; m_ref: (L, L) additive mask.
    # L is fully resident per step so a plain (numerically stable) softmax suffices.
    # TODO(synk): switch to an online-softmax (flash) tiling over the key axis for long L.
    q = q_ref[...]
    k = k_ref[...]
    v = v_ref[...]
    s = jnp.einsum('gqd,gkd->gqk', q, k, preferred_element_type=jnp.float32) * scale
    s = s + m_ref[...]                       # (L, L) broadcasts over the head-group axis
    s = s - jnp.max(s, axis=-1, keepdims=True)
    p = jnp.exp(s)
    p = p / jnp.sum(p, axis=-1, keepdims=True)
    o_ref[...] = jnp.einsum('gqk,gkd->gqd', p, v, preferred_element_type=jnp.float32)


# ---------------------------------------------------------------------------
# pallas_call wrappers
# ---------------------------------------------------------------------------

def _compiler_params(n_grid_dims):
    return pltpu.CompilerParams(
        dimension_semantics=("parallel",) * n_grid_dims,
        vmem_limit_bytes=_VMEM_LIMIT_BYTES,
    )


def _ln_matmul(x2, gamma, beta, w, b, *, apply_gelu):
    M, Din = x2.shape
    Dout = w.shape[1]
    fixed = 4 * (2 * Din * Dout + 2 * (2 * Din + Dout))      # weight + LN params + bias (2x buffered)
    per_row = 4 * (2 * Din + 2 * Dout)                       # x tile + out tile (2x buffered)
    tm = _pick_row_tile(M, per_row, fixed)
    return pl.pallas_call(
        partial(_ln_matmul_kernel, apply_gelu=apply_gelu),
        out_shape=jax.ShapeDtypeStruct((M, Dout), jnp.float32),
        grid_spec=pltpu.PrefetchScalarGridSpec(
            num_scalar_prefetch=0,
            grid=(M // tm,),
            in_specs=[
                pl.BlockSpec((tm, Din), lambda i: (i, 0)),
                pl.BlockSpec((1, Din), lambda i: (0, 0)),
                pl.BlockSpec((1, Din), lambda i: (0, 0)),
                pl.BlockSpec((Din, Dout), lambda i: (0, 0)),
                pl.BlockSpec((1, Dout), lambda i: (0, 0)),
            ],
            out_specs=pl.BlockSpec((tm, Dout), lambda i: (i, 0)),
        ),
        compiler_params=_compiler_params(1),
    )(x2,
      gamma.reshape(1, Din).astype(jnp.float32),
      beta.reshape(1, Din).astype(jnp.float32),
      w.astype(jnp.float32),
      b.reshape(1, Dout).astype(jnp.float32))


def _ln_mlp_fused_or_none(x2, gamma, beta, w_fc, b_fc, w_proj, b_proj):
    """Fused LN2 + c_fc + QuickGELU + c_proj + residual.  Returns None if the two
    weight matrices would not fit the VMEM budget (caller falls back to 2 kernels)."""
    M, D = x2.shape
    Fdim = w_fc.shape[1]
    fixed = 4 * (2 * D * Fdim + 2 * Fdim * D + 2 * (3 * D + Fdim))   # both weights + small vectors (2x)
    per_row = 4 * (2 * D + 2 * D + Fdim)                             # x tile, out tile (2x) + hidden scratch
    tm = _pick_row_tile(M, per_row, fixed)
    if fixed + tm * per_row > _VMEM_BUDGET:
        return None
    return pl.pallas_call(
        _ln_mlp_kernel,
        out_shape=jax.ShapeDtypeStruct((M, D), jnp.float32),
        grid_spec=pltpu.PrefetchScalarGridSpec(
            num_scalar_prefetch=0,
            grid=(M // tm,),
            in_specs=[
                pl.BlockSpec((tm, D), lambda i: (i, 0)),
                pl.BlockSpec((1, D), lambda i: (0, 0)),
                pl.BlockSpec((1, D), lambda i: (0, 0)),
                pl.BlockSpec((D, Fdim), lambda i: (0, 0)),
                pl.BlockSpec((1, Fdim), lambda i: (0, 0)),
                pl.BlockSpec((Fdim, D), lambda i: (0, 0)),
                pl.BlockSpec((1, D), lambda i: (0, 0)),
            ],
            out_specs=pl.BlockSpec((tm, D), lambda i: (i, 0)),
        ),
        compiler_params=_compiler_params(1),
    )(x2,
      gamma.reshape(1, D).astype(jnp.float32),
      beta.reshape(1, D).astype(jnp.float32),
      w_fc.astype(jnp.float32),
      b_fc.reshape(1, Fdim).astype(jnp.float32),
      w_proj.astype(jnp.float32),
      b_proj.reshape(1, D).astype(jnp.float32))


def _matmul_bias_residual(x2, w, b, residual):
    M, Din = x2.shape
    Dout = w.shape[1]
    fixed = 4 * (2 * Din * Dout + 2 * Dout)
    per_row = 4 * (2 * Din + 4 * Dout)                        # x + residual + out tiles (2x buffered)
    tm = _pick_row_tile(M, per_row, fixed)
    return pl.pallas_call(
        _matmul_bias_residual_kernel,
        out_shape=jax.ShapeDtypeStruct((M, Dout), jnp.float32),
        grid_spec=pltpu.PrefetchScalarGridSpec(
            num_scalar_prefetch=0,
            grid=(M // tm,),
            in_specs=[
                pl.BlockSpec((tm, Din), lambda i: (i, 0)),
                pl.BlockSpec((Din, Dout), lambda i: (0, 0)),
                pl.BlockSpec((1, Dout), lambda i: (0, 0)),
                pl.BlockSpec((tm, Dout), lambda i: (i, 0)),
            ],
            out_specs=pl.BlockSpec((tm, Dout), lambda i: (i, 0)),
        ),
        compiler_params=_compiler_params(1),
    )(x2, w.astype(jnp.float32), b.reshape(1, Dout).astype(jnp.float32), residual)


def _pick_head_group(bh: int, L: int, dh: int) -> int:
    """Largest divisor of B*H (capped at 16) whose per-step VMEM footprint fits budget."""
    fixed = 4 * 2 * L * L                               # mask (2x buffered)
    per_g = 4 * (4 * 2 * L * dh + 2 * L * L)            # q,k,v,o blocks (2x) + scores/probs temps
    for g in range(min(bh, 16), 0, -1):
        if bh % g == 0 and fixed + g * per_g <= _VMEM_BUDGET:
            return g
    return 1


def _attention(q, k, v, mask, scale):
    BH, L, dh = q.shape
    g = _pick_head_group(BH, L, dh)
    return pl.pallas_call(
        partial(_attention_kernel, scale=scale),
        out_shape=jax.ShapeDtypeStruct((BH, L, dh), jnp.float32),
        grid_spec=pltpu.PrefetchScalarGridSpec(
            num_scalar_prefetch=0,
            grid=(BH // g,),
            in_specs=[
                pl.BlockSpec((g, L, dh), lambda i: (i, 0, 0)),
                pl.BlockSpec((g, L, dh), lambda i: (i, 0, 0)),
                pl.BlockSpec((g, L, dh), lambda i: (i, 0, 0)),
                pl.BlockSpec((L, L), lambda i: (0, 0)),
            ],
            out_specs=pl.BlockSpec((g, L, dh), lambda i: (i, 0, 0)),
        ),
        compiler_params=_compiler_params(1),
    )(q, k, v, mask)


# ---------------------------------------------------------------------------
# Transformer forward (Pallas path)
# ---------------------------------------------------------------------------

def transformer_forward(x, params, n_head, attn_mask=None):
    """x: (L, N, D) float32 (PyTorch nn.MultiheadAttention LND layout).
    params: list of per-layer dicts.  Returns (L, N, D) float32."""
    L, N, D = x.shape
    H = n_head
    dh = D // H
    M = L * N
    scale = 1.0 / math.sqrt(dh)
    mask = (jnp.zeros((L, L), jnp.float32) if attn_mask is None
            else attn_mask.astype(jnp.float32))

    x2 = x.reshape(M, D).astype(jnp.float32)
    for p in params:
        # ----- attention sub-block: fused LN1 + QKV projection -----
        qkv = _ln_matmul(x2, p['ln1_g'], p['ln1_b'], p['w_qkv'], p['b_qkv'],
                         apply_gelu=False)                      # (M, 3D)
        qkv = qkv.reshape(L, N, 3, H, dh)
        q = jnp.transpose(qkv[:, :, 0], (1, 2, 0, 3)).reshape(N * H, L, dh)
        k = jnp.transpose(qkv[:, :, 1], (1, 2, 0, 3)).reshape(N * H, L, dh)
        v = jnp.transpose(qkv[:, :, 2], (1, 2, 0, 3)).reshape(N * H, L, dh)
        att = _attention(q, k, v, mask, scale)                  # (N*H, L, dh)
        att = jnp.transpose(att.reshape(N, H, L, dh), (2, 0, 1, 3)).reshape(M, D)
        # fused out_proj + residual add
        x2 = _matmul_bias_residual(att, p['w_out'], p['b_out'], x2)

        # ----- MLP sub-block: LN2 + c_fc + QuickGELU + c_proj + residual, fused if it fits -----
        fused = _ln_mlp_fused_or_none(x2, p['ln2_g'], p['ln2_b'],
                                      p['w_fc'], p['b_fc'], p['w_proj'], p['b_proj'])
        if fused is not None:
            x2 = fused
        else:
            h = _ln_matmul(x2, p['ln2_g'], p['ln2_b'], p['w_fc'], p['b_fc'],
                           apply_gelu=True)                      # (M, 4D)
            x2 = _matmul_bias_residual(h, p['w_proj'], p['b_proj'], x2)
    return x2.reshape(L, N, D)


# ---------------------------------------------------------------------------
# Pure-JAX reference (identical PyTorch semantics) for verification
# ---------------------------------------------------------------------------

def _reference(x, params, n_head, attn_mask=None):
    L, N, D = x.shape
    H = n_head
    dh = D // H
    scale = 1.0 / math.sqrt(dh)
    mask = (jnp.zeros((L, L), jnp.float32) if attn_mask is None
            else attn_mask.astype(jnp.float32))
    hp = lax.Precision.HIGHEST

    def ln(t, g, b):
        mu = jnp.mean(t, axis=-1, keepdims=True)
        var = jnp.mean((t - mu) ** 2, axis=-1, keepdims=True)
        return (t - mu) * lax.rsqrt(var + _LN_EPS) * g + b

    for p in params:
        h = ln(x, p['ln1_g'], p['ln1_b'])
        qkv = jnp.einsum('lnd,de->lne', h, p['w_qkv'], precision=hp) + p['b_qkv']
        qkv = qkv.reshape(L, N, 3, H, dh)
        q = jnp.transpose(qkv[:, :, 0], (1, 2, 0, 3))            # (N, H, L, dh)
        k = jnp.transpose(qkv[:, :, 1], (1, 2, 0, 3))
        v = jnp.transpose(qkv[:, :, 2], (1, 2, 0, 3))
        s = jnp.einsum('nhqd,nhkd->nhqk', q, k, precision=hp) * scale + mask
        s = s - jnp.max(s, axis=-1, keepdims=True)
        pm = jnp.exp(s)
        pm = pm / jnp.sum(pm, axis=-1, keepdims=True)
        att = jnp.einsum('nhqk,nhkd->nhqd', pm, v, precision=hp)  # (N, H, L, dh)
        att = jnp.transpose(att, (2, 0, 1, 3)).reshape(L, N, D)
        att = jnp.einsum('lnd,de->lne', att, p['w_out'], precision=hp) + p['b_out']
        x = x + att
        h = ln(x, p['ln2_g'], p['ln2_b'])
        h = jnp.einsum('lnd,de->lne', h, p['w_fc'], precision=hp) + p['b_fc']
        h = h * jax.nn.sigmoid(1.702 * h)
        h = jnp.einsum('lnd,de->lne', h, p['w_proj'], precision=hp) + p['b_proj']
        x = x + h
    return x


# ---------------------------------------------------------------------------
# Parameter construction + test
# ---------------------------------------------------------------------------

def _init_layer(key, d):
    ks = jax.random.split(key, 12)
    s_in = 1.0 / math.sqrt(d)
    s_hid = 1.0 / math.sqrt(4 * d)
    f32 = jnp.float32
    return dict(
        ln1_g=1.0 + 0.05 * jax.random.normal(ks[0], (d,), f32),
        ln1_b=0.05 * jax.random.normal(ks[1], (d,), f32),
        w_qkv=s_in * jax.random.normal(ks[2], (d, 3 * d), f32),
        b_qkv=0.05 * jax.random.normal(ks[3], (3 * d,), f32),
        w_out=s_in * jax.random.normal(ks[4], (d, d), f32),
        b_out=0.05 * jax.random.normal(ks[5], (d,), f32),
        ln2_g=1.0 + 0.05 * jax.random.normal(ks[6], (d,), f32),
        ln2_b=0.05 * jax.random.normal(ks[7], (d,), f32),
        w_fc=s_in * jax.random.normal(ks[8], (d, 4 * d), f32),
        b_fc=0.05 * jax.random.normal(ks[9], (4 * d,), f32),
        w_proj=s_hid * jax.random.normal(ks[10], (4 * d, d), f32),
        b_proj=0.05 * jax.random.normal(ks[11], (d,), f32),
    )


if __name__ == "__main__":
    key = jax.random.PRNGKey(0)
    SEQ, BATCH, WIDTH, HEADS, LAYERS = 8, 2, 32, 4, 2   # small deterministic test shapes

    k_x, k_p = jax.random.split(key)
    x = jax.random.normal(k_x, (SEQ, BATCH, WIDTH), dtype=jnp.float32)
    layer_keys = jax.random.split(k_p, LAYERS)
    params = [_init_layer(k, WIDTH) for k in layer_keys]

    out = transformer_forward(x, params, HEADS, attn_mask=None)
    out = jax.block_until_ready(out)

    ref = _reference(x, params, HEADS, attn_mask=None)
    assert out.shape == (SEQ, BATCH, WIDTH)
    err = float(jnp.max(jnp.abs(out - ref)))
    assert err < 2e-3, f"mismatch vs reference: max abs err = {err}"

    print("KERNEL_OK")
</pallas_src>

<mosaic_0001>
module attributes {stable_mosaic.version = 11 : i64} {
  func.func @_ln_matmul_kernel(%arg0: i32, %arg1: memref<16x32xf32, #tpu.memory_space<vmem>>, %arg2: memref<1x32xf32, #tpu.memory_space<vmem>>, %arg3: memref<1x32xf32, #tpu.memory_space<vmem>>, %arg4: memref<32x96xf32, #tpu.memory_space<vmem>>, %arg5: memref<1x96xf32, #tpu.memory_space<vmem>>, %arg6: memref<16x96xf32, #tpu.memory_space<vmem>>) attributes {dimension_semantics = [#tpu.dimension_semantics<parallel>], iteration_bounds = array<i64: 1>, scalar_prefetch = 0 : i64, scratch_operands = 0 : i64, tpu.core_type = #tpu.core_type<tc>, window_params = [{transform_indices = @transform_0, window_bounds = array<i64: 16, 32>}, {pipeline_mode = #tpu.pipeline_mode<synchronous>, transform_indices = @transform_1, window_bounds = array<i64: 1, 32>}, {pipeline_mode = #tpu.pipeline_mode<synchronous>, transform_indices = @transform_2, window_bounds = array<i64: 1, 32>}, {pipeline_mode = #tpu.pipeline_mode<synchronous>, transform_indices = @transform_3, window_bounds = array<i64: 32, 96>}, {pipeline_mode = #tpu.pipeline_mode<synchronous>, transform_indices = @transform_4, window_bounds = array<i64: 1, 96>}, {transform_indices = @transform_5, window_bounds = array<i64: 16, 96>}]} {
    %c0 = arith.constant 0 : index
    %c0_0 = arith.constant 0 : index
    %0 = vector.load %arg1[%c0, %c0_0] : memref<16x32xf32, #tpu.memory_space<vmem>>, vector<16x32xf32>
    %cst = arith.constant dense<0.000000e+00> : vector<16xf32>
    %1 = vector.multi_reduction <add>, %0, %cst [1] : vector<16x32xf32> to vector<16xf32>
    %2 = vector.shape_cast %1 : vector<16xf32> to vector<16x1xf32>
    %cst_1 = arith.constant 3.200000e+01 : f32
    %3 = vector.broadcast %cst_1 : f32 to vector<16x1xf32>
    %4 = arith.divf %2, %3 : vector<16x1xf32>
    %5 = vector.broadcast %4 : vector<16x1xf32> to vector<16x32xf32>
    %6 = arith.subf %0, %5 : vector<16x32xf32>
    %7 = arith.mulf %6, %6 : vector<16x32xf32>
    %cst_2 = arith.constant dense<0.000000e+00> : vector<16xf32>
    %8 = vector.multi_reduction <add>, %7, %cst_2 [1] : vector<16x32xf32> to vector<16xf32>
    %9 = vector.shape_cast %8 : vector<16xf32> to vector<16x1xf32>
    %cst_3 = arith.constant 3.200000e+01 : f32
    %10 = vector.broadcast %cst_3 : f32 to vector<16x1xf32>
    %11 = arith.divf %9, %10 : vector<16x1xf32>
    %cst_4 = arith.constant 9.99999974E-6 : f32
    %12 = vector.broadcast %cst_4 : f32 to vector<16x1xf32>
    %13 = arith.addf %11, %12 : vector<16x1xf32>
    %14 = math.rsqrt %13 : vector<16x1xf32>
    %15 = vector.broadcast %14 : vector<16x1xf32> to vector<16x32xf32>
    %16 = arith.mulf %6, %15 : vector<16x32xf32>
    %c0_5 = arith.constant 0 : index
    %c0_6 = arith.constant 0 : index
    %17 = vector.load %arg2[%c0_5, %c0_6] : memref<1x32xf32, #tpu.memory_space<vmem>>, vector<1x32xf32>
    %18 = vector.broadcast %17 : vector<1x32xf32> to vector<16x32xf32>
    %19 = arith.mulf %16, %18 : vector<16x32xf32>
    %c0_7 = arith.constant 0 : index
    %c0_8 = arith.constant 0 : index
    %20 = vector.load %arg3[%c0_7, %c0_8] : memref<1x32xf32, #tpu.memory_space<vmem>>, vector<1x32xf32>
    %21 = vector.broadcast %20 : vector<1x32xf32> to vector<16x32xf32>
    %22 = arith.addf %19, %21 : vector<16x32xf32>
    %c0_9 = arith.constant 0 : index
    %c0_10 = arith.constant 0 : index
    %23 = vector.load %arg4[%c0_9, %c0_10] : memref<32x96xf32, #tpu.memory_space<vmem>>, vector<32x96xf32>
    %cst_11 = arith.constant dense<0.000000e+00> : vector<16x96xf32>
    %24 = tpu.matmul %22, %23, %cst_11 {dimension_numbers = #tpu.dot_dimension_numbers<[1], [0], [0], [1], [0, 0, 1, 1], [], []>} : vector<16x32xf32>, vector<32x96xf32>, vector<16x96xf32> -> vector<16x96xf32>
    %c0_12 = arith.constant 0 : index
    %c0_13 = arith.constant 0 : index
    %25 = vector.load %arg5[%c0_12, %c0_13] : memref<1x96xf32, #tpu.memory_space<vmem>>, vector<1x96xf32>
    %26 = vector.broadcast %25 : vector<1x96xf32> to vector<16x96xf32>
    %27 = arith.addf %24, %26 : vector<16x96xf32>
    %c0_14 = arith.constant 0 : index
    %c0_15 = arith.constant 0 : index
    %28 = vector.load %arg6[%c0_14, %c0_15] : memref<16x96xf32, #tpu.memory_space<vmem>>, vector<16x96xf32>
    tpu.vector_store %arg6[%c0_14, %c0_15], %27 {strides = array<i32>} : memref<16x96xf32, #tpu.memory_space<vmem>>, vector<16x96xf32>,
    return
  }
  func.func @transform_0(%arg0: i32) -> (i32, i32) {
    %c0_i32 = arith.constant 0 : i32
    %c0_i32_0 = arith.constant 0 : i32
    return %arg0, %c0_i32 : i32, i32
  }
  func.func @transform_1(%arg0: i32) -> (i32, i32) {
    %c0_i32 = arith.constant 0 : i32
    %c0_i32_0 = arith.constant 0 : i32
    %c0_i32_1 = arith.constant 0 : i32
    return %c0_i32, %c0_i32_0 : i32, i32
  }
  func.func @transform_2(%arg0: i32) -> (i32, i32) {
    %c0_i32 = arith.constant 0 : i32
    %c0_i32_0 = arith.constant 0 : i32
    %c0_i32_1 = arith.constant 0 : i32
    return %c0_i32, %c0_i32_0 : i32, i32
  }
  func.func @transform_3(%arg0: i32) -> (i32, i32) {
    %c0_i32 = arith.constant 0 : i32
    %c0_i32_0 = arith.constant 0 : i32
    %c0_i32_1 = arith.constant 0 : i32
    return %c0_i32, %c0_i32_0 : i32, i32
  }
  func.func @transform_4(%arg0: i32) -> (i32, i32) {
    %c0_i32 = arith.constant 0 : i32
    %c0_i32_0 = arith.constant 0 : i32
    %c0_i32_1 = arith.constant 0 : i32
    return %c0_i32, %c0_i32_0 : i32, i32
  }
  func.func @transform_5(%arg0: i32) -> (i32, i32) {
    %c0_i32 = arith.constant 0 : i32
    %c0_i32_0 = arith.constant 0 : i32
    return %arg0, %c0_i32 : i32, i32
  }
}

</mosaic_0001>

<llo_original>
// kernel: tpu_custom_call.1
$region0: #{tpu_custom_call.1}
  #allocation0 [shape = 'u32[]', space=smem, size = 0x4, offset = 0x4, fixed_abs, tag = 'smem constant byte address 0x4 - core index']
  #allocation1 [shape = 'u32[72,128]{1,0:T(1,128)}', space=vmem, size = 0x9000, scoped, tag = 'internal scratch']
  %s0 = inlined_call_operand.hbm [shape: f32[16,32], index: 0, kind: input, shape index: {}]
  %s1 = inlined_call_operand.hbm [shape: f32[1,32], index: 1, kind: input, shape index: {}]
  %s2 = inlined_call_operand.vmem [shape: f32[1,32], index: 2, kind: input, shape index: {}]
  %s3 = inlined_call_operand.hbm [shape: f32[32,96], index: 3, kind: input, shape index: {}]
  %s4 = inlined_call_operand.vmem [shape: f32[1,96], index: 4, kind: input, shape index: {}]
  %s5 = inlined_call_operand.hbm [shape: f32[16,96], index: 5, kind: output, shape index: {}]
  %s6 = sld [smem:[#allocation0]]
  $region42: #{tpu_custom_call.1} parent=0
    _
  %s8 = ssub.s32 1, %s6
  %s9 = scalar_select 0, %s8, %s6
  $region1: #{tpu_custom_call.1} parent=0
    #allocation2 [shape = 'u8[8192]{0}', space=vmem, size = 0x2000, scoped, tag = 'input window, operand 0, single buffered']
    #allocation3 [shape = 's32[1]{0}', space=sflag, size = 0x4, scoped, tag = 'scoped memory for tpu_custom_call.1']
    #allocation4 [shape = 's32[1]{0}', space=sflag, size = 0x4, scoped, tag = 'scoped memory for tpu_custom_call.1']
    #allocation5 [shape = 'u8[512]{0}', space=vmem, size = 0x400, scoped, tag = 'input window, operand 1, single buffered']
    #allocation6 [shape = 's32[1]{0}', space=sflag, size = 0x4, scoped, tag = 'scoped memory for tpu_custom_call.1']
    #allocation7 [shape = 'u8[16384]{0}', space=vmem, size = 0x4000, scoped, tag = 'input window, operand 3, single buffered']
    #allocation8 [shape = 'u8[8192]{0}', space=vmem, size = 0x2000, scoped, tag = 'output window, operand 0, single buffered']
    %10 = vsyncpa [#allocation3], 0
    %11 = vsyncpa [#allocation6], 0
    %12 = vsyncpa [#allocation4], 0
    // Predicated region
    $region2: #{tpu_custom_call.1} parent=1 // pred_check
      _
    $region3: #{tpu_custom_call.1} parent=1 // pred_check_branch
      %14 = sbr.rel (0) target = $region5
    $region4: #{tpu_custom_call.1} parent=1 // pred_region
      %16 = vsyncadd [#allocation3], 0
      %s17 = sshll.u32 %s0, 4
      %s18 = int_to_ptr.hbm [resolvable:$true] %s17
      %s19 = sshll.u32 [#allocation2], 4
      %s20 = int_to_ptr.vmem [resolvable:$true] %s19
      %25 = dma.hbm_to_vmem [thread:$0]  %s18, 256, %s20, [#allocation3], 128, 128, 8
    $region5: #{tpu_custom_call.1} parent=1 // pred_fallthru
      _
    // Predicated region
    $region6: #{tpu_custom_call.1} parent=1 // pred_check
      _
    $region7: #{tpu_custom_call.1} parent=1 // pred_check_branch
      %27 = sbr.rel (0) target = $region9
    $region8: #{tpu_custom_call.1} parent=1 // pred_region
      %29 = vsyncadd [#allocation6], 0
      %s31 = sshll.u32 %s1, 4
      %s32 = int_to_ptr.hbm [resolvable:$true] %s31
      %s33 = sshll.u32 [#allocation5], 4
      %s34 = int_to_ptr.vmem [resolvable:$true] %s33
      %36 = dma.hbm_to_vmem [thread:$0]  %s32, 16, %s34, [#allocation6]
    $region9: #{tpu_custom_call.1} parent=1 // pred_fallthru
      _
    // Predicated region
    $region10: #{tpu_custom_call.1} parent=1 // pred_check
      _
    $region11: #{tpu_custom_call.1} parent=1 // pred_check_branch
      %38 = sbr.rel (0) target = $region13
    $region12: #{tpu_custom_call.1} parent=1 // pred_region
      _
    $region13: #{tpu_custom_call.1} parent=1 // pred_fallthru
      _
    // Predicated region
    $region14: #{tpu_custom_call.1} parent=1 // pred_check
      _
    $region15: #{tpu_custom_call.1} parent=1 // pred_check_branch
      %40 = sbr.rel (0) target = $region17
    $region16: #{tpu_custom_call.1} parent=1 // pred_region
      %42 = vsyncadd [#allocation6], 0
      %s43 = sshll.u32 %s3, 4
      %s44 = int_to_ptr.hbm [resolvable:$true] %s43
      %s45 = sshll.u32 [#allocation7], 4
      %s46 = int_to_ptr.vmem [resolvable:$true] %s45
      %51 = dma.hbm_to_vmem [thread:$0]  %s44, 512, %s46, [#allocation6], 128, 128, 8
    $region17: #{tpu_custom_call.1} parent=1 // pred_fallthru
      _
    // Predicated region
    $region18: #{tpu_custom_call.1} parent=1 // pred_check
      _
    $region19: #{tpu_custom_call.1} parent=1 // pred_check_branch
      %53 = sbr.rel (0) target = $region21
    $region20: #{tpu_custom_call.1} parent=1 // pred_region
      _
    $region21: #{tpu_custom_call.1} parent=1 // pred_fallthru
      _
    // Predicated region
    $region22: #{tpu_custom_call.1} parent=1 // pred_check
      _
    $region23: #{tpu_custom_call.1} parent=1 // pred_check_branch
      %55 = sbr.rel (0) target = $region25
    $region24: #{tpu_custom_call.1} parent=1 // pred_region
      %57 = dma.done [#allocation3], 256
    $region25: #{tpu_custom_call.1} parent=1 // pred_fallthru
      _
    // Predicated region
    $region26: #{tpu_custom_call.1} parent=1 // pred_check
      _
    $region27: #{tpu_custom_call.1} parent=1 // pred_check_branch
      %59 = sbr.rel (0) target = $region29
    $region28: #{tpu_custom_call.1} parent=1 // pred_region
      %61 = dma.done [#allocation6], 16
    $region29: #{tpu_custom_call.1} parent=1 // pred_fallthru
      _
    // Predicated region
    $region30: #{tpu_custom_call.1} parent=1 // pred_check
      _
    $region31: #{tpu_custom_call.1} parent=1 // pred_check_branch
      %63 = sbr.rel (0) target = $region33
    $region32: #{tpu_custom_call.1} parent=1 // pred_region
      %65 = dma.done [#allocation6], 512
    $region33: #{tpu_custom_call.1} parent=1 // pred_fallthru
      _
    %v66 = vld [vmem:[#allocation2] sm:$0xff]
    %v67 = vld [vmem:[#allocation2 + $0x8] sm:$0xff]
    %vm68 = vcmask 261120
    %v69 = vsel %vm68, %v66, 0.0
    %70 = vadd.xlane.f32.xlu0 %v69
    %v71 = vpop.xlane.xlu0 %70
    %v72 = vsel %vm68, %v67, 0.0
    %73 = vadd.xlane.f32.xlu0 %v72
    %v74 = vpop.xlane.xlu0 %73
    %v75 = vrcp.pop 32.0
    %v76 = vmul.f32 32.0, %v75
    %v77 = vsub.f32 1.0, %v76
    %v78 = vmul.f32 %v75, %v77
    %v79 = vadd.f32 %v75, %v78
    %vm80 = vweird.f32 %v75
    %v81 = vsel %vm80, %v75, %v79
    %v82 = vmul.f32 %v71, %v81
    %v83 = vmul.f32 %v74, %v81
    %v84 = vsub.f32 %v66, %v82
    %v85 = vsub.f32 %v67, %v83
    %v86 = vmul.f32 %v84, %v84
    %v87 = vmul.f32 %v85, %v85
    %v88 = vsel %vm68, %v86, 0.0
    %89 = vadd.xlane.f32.xlu0 %v88
    %v90 = vpop.xlane.xlu0 %89
    %v91 = vsel %vm68, %v87, 0.0
    %92 = vadd.xlane.f32.xlu0 %v91
    %v93 = vpop.xlane.xlu0 %92
    %v94 = vmul.f32 %v90, %v81
    %v95 = vmul.f32 %v93, %v81
    %v96 = vadd.f32 %v94, 1e-05
    %v97 = vadd.f32 %v95, 1e-05
    %v98 = vrsqrt.pop %v96
    %v99 = vmul.f32 %v98, %v96
    %v100 = vmul.f32 %v99, %v98
    %v101 = vmul.f32 0.5, %v100
    %v102 = vsub.f32 1.5, %v101
    %v103 = vmul.f32 %v98, %v102
    %vm104 = vweird.f32 %v96
    %vm105 = vweird.f32 %v98
    %vm106 = vmor %vm104, %vm105
    %v107 = vsel %vm106, %v98, %v103
    %v108 = vrsqrt.pop %v97
    %v109 = vmul.f32 %v108, %v97
    %v110 = vmul.f32 %v109, %v108
    %v111 = vmul.f32 0.5, %v110
    %v112 = vsub.f32 1.5, %v111
    %v113 = vmul.f32 %v108, %v112
    %vm114 = vweird.f32 %v97
    %vm115 = vweird.f32 %v108
    %vm116 = vmor %vm114, %vm115
    %v117 = vsel %vm116, %v108, %v113
    %v118 = vmul.f32 %v84, %v107
    %v119 = vmul.f32 %v85, %v117
    %v120 = vld [vmem:[#allocation5] sm:$0x1]
    %v122 = vperm.slane %v120, 0
    %v124 = vmul.f32 %v118, %v122
    %v125 = vmul.f32 %v119, %v122
    %v126 = vld [vmem:[%s2] sm:$0x1]
    %v128 = vperm.slane %v126, 0
    %v130 = vadd.f32 %v124, %v128
    %v131 = vadd.f32 %v125, %v128
    %v132 = vld [vmem:[#allocation7] sm:$0xff]
    %v133 = vld [vmem:[#allocation7 + $0x8] sm:$0xff]
    %v134 = vld [vmem:[#allocation7 + $0x10] sm:$0xff]
    %v135 = vld [vmem:[#allocation7 + $0x18] sm:$0xff]
    %v136 = vld [vmem:[%s4] sm:$0x1]
    %v138 = vperm.slane %v136, 0
    %v141 = vsel %vm68, %v130, 0
    %v144 = vsel %vm68, %v131, 0
    %146 = vmatpush.msra.mxu0 0.0
    %147 = vmatpush.msra.mxu0 0.0
    %148 = vmatpush.msra.mxu0 0.0
    %149 = vmatpush.msra.mxu0 0.0
    %150 = vmatpush.msra.mxu0 0.0
    %151 = vmatpush.msra.mxu0 0.0
    %152 = vmatpush.msra.mxu0 0.0
    %153 = vmatpush.msra.mxu0 0.0
    %154 = vmatpush.msra.mxu0 0.0
    %155 = vmatpush.msra.mxu0 0.0
    %156 = vmatpush.msra.mxu0 0.0
    %157 = vmatpush.msra.mxu0 0.0
    %158 = vmatpush.msra.mxu0 %v135
    %159 = vmatpush.msra.mxu0 %v134
    %160 = vmatpush.msra.mxu0 %v133
    %161 = vmatpush.msra.mxu0 %v132
    %162 = vmatmul.f32.gmra.mxu0 %v141
    %v163 = vpop.f32.mrf.mxu0
    %v164 = vadd.f32 %v138, %v163
    %165 = vmatmul.f32.gmra.mxu0 %v144
    %v166 = vpop.f32.mrf.mxu0
    %v167 = vadd.f32 %v138, %v166
    %168 = vdwg.mxu0
    %vm169 = vcmask 785408
    %170 = vst.msk [vmem:[#allocation8] sm:$0xff] %vm169, %v164
    %171 = vst.msk [vmem:[#allocation8 + $0x8] sm:$0xff] %vm169, %v167
    // Predicated region
    $region34: #{tpu_custom_call.1} parent=1 // pred_check
      _
    $region35: #{tpu_custom_call.1} parent=1 // pred_check_branch
      %173 = sbr.rel (0) target = $region37
    $region36: #{tpu_custom_call.1} parent=1 // pred_region
      %175 = vsyncadd [#allocation4], 0
      %s176 = sshll.u32 [#allocation8], 4
      %s177 = int_to_ptr.vmem [resolvable:$true] %s176
      %s178 = sshll.u32 %s5, 4
      %s179 = int_to_ptr.hbm [resolvable:$true] %s178
      %184 = dma.vmem_to_hbm [thread:$0]  %s177, 256, %s179, [#allocation4], 128, 128, 8
    $region37: #{tpu_custom_call.1} parent=1 // pred_fallthru
      _
    // Predicated region
    $region38: #{tpu_custom_call.1} parent=1 // pred_check
      _
    $region39: #{tpu_custom_call.1} parent=1 // pred_check_branch
      %186 = sbr.rel (0) target = $region41
    $region40: #{tpu_custom_call.1} parent=1 // pred_region
      %188 = dma.done [#allocation4], 256
    $region41: #{tpu_custom_call.1} parent=1 // pred_fallthru
      _
    %189 = vsyncpa [#allocation3], 1
    %190 = vsyncpa [#allocation6], 1
    %191 = vsyncpa [#allocation4], 1

</llo_original>
